<compile_context>
chip_gen: v7x
topology: tpu7x:2x2x1
jax: 0.10.0
libtpu: 0.0.40
codegen_flags: <defaults>
</compile_context>

<pallas_src>
import functools

import jax
import jax.numpy as jnp
from jax.experimental import pallas as pl
from jax.experimental.pallas import tpu as pltpu


# Shared tile-size caps (safe for v5e / v6e / v7x scoped-VMEM defaults).
_TM_MAX = 256
_TN_MAX = 256
_TK_MAX = 512


def _round_up(x, m):
    return (x + m - 1) // m * m


def _linear_kernel(x_ref, wt_ref, b_ref, o_ref, acc_ref):
    """Computes one (tm, tn) output tile, accumulating over the K grid axis."""
    k = pl.program_id(2)

    @pl.when(k == 0)
    def _init():
        acc_ref[...] = jnp.zeros_like(acc_ref)

    # bf16 x bf16 -> f32 accumulation on the MXU.
    acc_ref[...] += jnp.dot(
        x_ref[...], wt_ref[...], preferred_element_type=jnp.float32
    )

    @pl.when(k == pl.num_programs(2) - 1)
    def _finalize():
        # Bias add + downcast once per output tile (off the per-K critical path).
        o_ref[...] = (acc_ref[...] + b_ref[...]).astype(o_ref.dtype)


def prepare_upsample_params(weight, bias, *, compute_dtype=jnp.bfloat16):
    """One-time parameter preparation (do NOT call per step).

    weight : (dim_out, dim_in)  -- PyTorch nn.Linear convention
    bias   : (dim_out,)
    Returns:
      w_t : (k_pad, n_pad) compute_dtype, pre-transposed + zero padded
      b   : (1, n_pad)     float32, zero padded
      dim_out : int (original, for slicing the padded output)
    """
    dim_out, dim_in = weight.shape
    tk = min(_TK_MAX, _round_up(dim_in, 128))
    tn = min(_TN_MAX, _round_up(dim_out, 128))
    k_pad = _round_up(dim_in, tk)
    n_pad = _round_up(dim_out, tn)

    w_t = jnp.transpose(weight)  # (dim_in, dim_out) -- done once, not per call
    w_t = jnp.pad(w_t, ((0, k_pad - dim_in), (0, n_pad - dim_out)))
    w_t = w_t.astype(compute_dtype)

    b = jnp.pad(bias.astype(jnp.float32), (0, n_pad - dim_out)).reshape(1, n_pad)
    return w_t, b, dim_out


@functools.partial(jax.jit, static_argnames=("dim_out",))
def upsample_forward(x, w_t, b, dim_out):
    """Pallas equivalent of `nn.Linear(dim_in, dim_out)(x)`.

    x   : (..., dim_in)
    w_t : prepared weight from prepare_upsample_params, (k_pad, n_pad)
    b   : prepared bias, (1, n_pad) float32
    """
    k_pad, n_pad = w_t.shape
    dim_in = x.shape[-1]
    lead_shape = x.shape[:-1]
    m = 1
    for d in lead_shape:
        m *= d

    compute_dtype = w_t.dtype
    tm = min(_TM_MAX, _round_up(max(m, 1), 16))
    tn = min(_TN_MAX, n_pad)
    tk = min(_TK_MAX, k_pad)
    m_pad = _round_up(m, tm)

    # Flatten leading dims, cast activations to the MXU dtype, zero-pad M / K.
    x2d = x.reshape(m, dim_in).astype(compute_dtype)
    x2d = jnp.pad(x2d, ((0, m_pad - m), (0, k_pad - dim_in)))

    grid = (m_pad // tm, n_pad // tn, k_pad // tk)

    y2d = pl.pallas_call(
        _linear_kernel,
        out_shape=jax.ShapeDtypeStruct((m_pad, n_pad), x.dtype),
        grid_spec=pltpu.PrefetchScalarGridSpec(
            num_scalar_prefetch=0,
            grid=grid,
            in_specs=[
                pl.BlockSpec((tm, tk), lambda i, j, k: (i, k)),   # activations
                pl.BlockSpec((tk, tn), lambda i, j, k: (k, j)),   # weight^T
                pl.BlockSpec((1, tn), lambda i, j, k: (0, j)),    # bias row
            ],
            out_specs=pl.BlockSpec((tm, tn), lambda i, j, k: (i, j)),
            scratch_shapes=[pltpu.VMEM((tm, tn), jnp.float32)],
        ),
        compiler_params=pltpu.CompilerParams(
            dimension_semantics=("parallel", "parallel", "arbitrary")
        ),
    )(x2d, w_t, b)

    return y2d[:m, :dim_out].reshape(*lead_shape, dim_out)


if __name__ == "__main__":
    # Small shapes implied by the module: Linear over the last dim.
    batch, seq, dim_in, dim_out = 2, 8, 32, 16

    key = jax.random.PRNGKey(0)
    kx, kw, kb = jax.random.split(key, 3)

    x = jax.random.normal(kx, (batch, seq, dim_in), dtype=jnp.float32)

    # Deterministic params mirroring nn.Linear's uniform(-1/sqrt(fan_in), ...).
    bound = 1.0 / (dim_in ** 0.5)
    weight = jax.random.uniform(kw, (dim_out, dim_in), jnp.float32, -bound, bound)
    bias = jax.random.uniform(kb, (dim_out,), jnp.float32, -bound, bound)

    # One-time prep: transpose + pad + bf16 cast (outside the step loop).
    w_t, b_prepped, n_out = prepare_upsample_params(weight, bias)

    y = upsample_forward(x, w_t, b_prepped, n_out)
    jax.block_until_ready(y)
    assert y.shape == (batch, seq, dim_out)

    # Reference with identical bf16-input / f32-accumulate math (tight check).
    ref_bf16 = (
        jnp.dot(
            x.astype(jnp.bfloat16).reshape(-1, dim_in),
            weight.T.astype(jnp.bfloat16),
            preferred_element_type=jnp.float32,
        )
        + bias
    ).reshape(batch, seq, dim_out)
    assert jnp.allclose(y, ref_bf16, atol=1e-3, rtol=1e-3)

    # Sanity vs exact f32 torch-Linear semantics (bf16 rounding tolerance).
    ref_f32 = x @ weight.T + bias
    assert jnp.allclose(y, ref_f32, atol=3e-2, rtol=3e-2)

    print("KERNEL_OK")
</pallas_src>

<mosaic_0001>
module attributes {stable_mosaic.version = 11 : i64} {
  func.func @_linear_kernel(%arg0: i32, %arg1: i32, %arg2: i32, %arg3: memref<16x128xbf16, #tpu.memory_space<vmem>>, %arg4: memref<128x128xbf16, #tpu.memory_space<vmem>>, %arg5: memref<1x128xf32, #tpu.memory_space<vmem>>, %arg6: memref<16x128xf32, #tpu.memory_space<vmem>>, %arg7: memref<16x128xf32, #tpu.memory_space<vmem>>) attributes {dimension_semantics = [#tpu.dimension_semantics<parallel>, #tpu.dimension_semantics<parallel>, #tpu.dimension_semantics<arbitrary>], iteration_bounds = array<i64: 1, 1, 1>, scalar_prefetch = 0 : i64, scratch_operands = 1 : i64, tpu.core_type = #tpu.core_type<tc>, window_params = [{transform_indices = @transform_0, window_bounds = array<i64: 16, 128>}, {transform_indices = @transform_1, window_bounds = array<i64: 128, 128>}, {transform_indices = @transform_2, window_bounds = array<i64: 1, 128>}, {transform_indices = @transform_3, window_bounds = array<i64: 16, 128>}]} {
    %c0_i32 = arith.constant 0 : i32
    %0 = arith.cmpi eq, %arg2, %c0_i32 : i32
    %1 = arith.extui %0 : i1 to i32
    %c0_i32_0 = arith.constant 0 : i32
    %2 = arith.cmpi ne, %1, %c0_i32_0 : i32
    scf.if %2 {
      %cst_10 = arith.constant 0.000000e+00 : f32
      %12 = vector.broadcast %cst_10 : f32 to vector<16x128xf32>
      %c0_11 = arith.constant 0 : index
      %c0_12 = arith.constant 0 : index
      %13 = vector.load %arg7[%c0_11, %c0_12] : memref<16x128xf32, #tpu.memory_space<vmem>>, vector<16x128xf32>
      tpu.vector_store %arg7[%c0_11, %c0_12], %12 {strides = array<i32>} : memref<16x128xf32, #tpu.memory_space<vmem>>, vector<16x128xf32>,
    } else {
    }
    %c0 = arith.constant 0 : index
    %c0_1 = arith.constant 0 : index
    %3 = vector.load %arg7[%c0, %c0_1] : memref<16x128xf32, #tpu.memory_space<vmem>>, vector<16x128xf32>
    %c0_2 = arith.constant 0 : index
    %c0_3 = arith.constant 0 : index
    %4 = vector.load %arg3[%c0_2, %c0_3] : memref<16x128xbf16, #tpu.memory_space<vmem>>, vector<16x128xbf16>
    %c0_4 = arith.constant 0 : index
    %c0_5 = arith.constant 0 : index
    %5 = vector.load %arg4[%c0_4, %c0_5] : memref<128x128xbf16, #tpu.memory_space<vmem>>, vector<128x128xbf16>
    %cst = arith.constant dense<0.000000e+00> : vector<16x128xf32>
    %6 = tpu.matmul %4, %5, %cst {dimension_numbers = #tpu.dot_dimension_numbers<[1], [0], [0], [1], [0, 0, 1, 1], [], []>} : vector<16x128xbf16>, vector<128x128xbf16>, vector<16x128xf32> -> vector<16x128xf32>
    %7 = arith.addf %3, %6 : vector<16x128xf32>
    %c0_6 = arith.constant 0 : index
    %c0_7 = arith.constant 0 : index
    %8 = vector.load %arg7[%c0_6, %c0_7] : memref<16x128xf32, #tpu.memory_space<vmem>>, vector<16x128xf32>
    tpu.vector_store %arg7[%c0_6, %c0_7], %7 {strides = array<i32>} : memref<16x128xf32, #tpu.memory_space<vmem>>, vector<16x128xf32>,
    %c0_i32_8 = arith.constant 0 : i32
    %9 = arith.cmpi eq, %arg2, %c0_i32_8 : i32
    %10 = arith.extui %9 : i1 to i32
    %c0_i32_9 = arith.constant 0 : i32
    %11 = arith.cmpi ne, %10, %c0_i32_9 : i32
    scf.if %11 {
      %c0_10 = arith.constant 0 : index
      %c0_11 = arith.constant 0 : index
      %12 = vector.load %arg7[%c0_10, %c0_11] : memref<16x128xf32, #tpu.memory_space<vmem>>, vector<16x128xf32>
      %c0_12 = arith.constant 0 : index
      %c0_13 = arith.constant 0 : index
      %13 = vector.load %arg5[%c0_12, %c0_13] : memref<1x128xf32, #tpu.memory_space<vmem>>, vector<1x128xf32>
      %14 = vector.broadcast %13 : vector<1x128xf32> to vector<16x128xf32>
      %15 = arith.addf %12, %14 : vector<16x128xf32>
      %c0_14 = arith.constant 0 : index
      %c0_15 = arith.constant 0 : index
      %16 = vector.load %arg6[%c0_14, %c0_15] : memref<16x128xf32, #tpu.memory_space<vmem>>, vector<16x128xf32>
      tpu.vector_store %arg6[%c0_14, %c0_15], %15 {strides = array<i32>} : memref<16x128xf32, #tpu.memory_space<vmem>>, vector<16x128xf32>,
    } else {
    }
    return
  }
  func.func @transform_0(%arg0: i32, %arg1: i32, %arg2: i32) -> (i32, i32) {
    %c0_i32 = arith.constant 0 : i32
    return %arg0, %arg2 : i32, i32
  }
  func.func @transform_1(%arg0: i32, %arg1: i32, %arg2: i32) -> (i32, i32) {
    %c0_i32 = arith.constant 0 : i32
    return %arg2, %arg1 : i32, i32
  }
  func.func @transform_2(%arg0: i32, %arg1: i32, %arg2: i32) -> (i32, i32) {
    %c0_i32 = arith.constant 0 : i32
    %c0_i32_0 = arith.constant 0 : i32
    return %c0_i32, %arg1 : i32, i32
  }
  func.func @transform_3(%arg0: i32, %arg1: i32, %arg2: i32) -> (i32, i32) {
    %c0_i32 = arith.constant 0 : i32
    return %arg0, %arg1 : i32, i32
  }
}

</mosaic_0001>

<llo_original>
// kernel: upsample_forward.1
$region0: #{upsample_forward.1}
  #allocation0 [shape = 'u32[]', space=smem, size = 0x4, offset = 0x4, fixed_abs, tag = 'smem constant byte address 0x4 - core index']
  #allocation1 [shape = 'u32[144,128]{1,0:T(1,128)}', space=vmem, size = 0x12000, scoped, tag = 'internal scratch']
  #allocation2 [shape = 'f32[16,128]{1,0:T(8,128)}', space=vmem, size = 0x2000, scoped, tag = 'scratch operand']
  %s0 = inlined_call_operand.vmem [shape: bf16[16,128], index: 0, kind: input, shape index: {}]
  %s1 = inlined_call_operand.hbm [shape: bf16[128,128], index: 1, kind: input, shape index: {}]
  %s2 = inlined_call_operand.vmem [shape: f32[1,128], index: 2, kind: input, shape index: {}]
  %s3 = inlined_call_operand.vmem [shape: f32[16,128], index: 3, kind: output, shape index: {}]
  %s4 = sld [smem:[#allocation0]]
  $region34: #{upsample_forward.1} parent=0
    _
  %s6 = ssub.s32 1, %s4
  %s7 = scalar_select 0, %s6, %s4
  $region1: #{upsample_forward.1} parent=0
    #allocation3 [shape = 'u8[32768]{0}', space=vmem, size = 0x8000, scoped, tag = 'input window, operand 1, single buffered']
    #allocation4 [shape = 's32[1]{0}', space=sflag, size = 0x4, scoped, tag = 'scoped memory for upsample_forward.1']
    %8 = vsyncpa [#allocation4], 0
    // Predicated region
    $region2: #{upsample_forward.1} parent=1 // pred_check
      _
    $region3: #{upsample_forward.1} parent=1 // pred_check_branch
      %10 = sbr.rel (0) target = $region5
    $region4: #{upsample_forward.1} parent=1 // pred_region
      _
    $region5: #{upsample_forward.1} parent=1 // pred_fallthru
      _
    // Predicated region
    $region6: #{upsample_forward.1} parent=1 // pred_check
      _
    $region7: #{upsample_forward.1} parent=1 // pred_check_branch
      %12 = sbr.rel (0) target = $region9
    $region8: #{upsample_forward.1} parent=1 // pred_region
      %s14 = ssub.s32 1024, 1024
      %15 = vsyncadd [#allocation4], %s14
      %s16 = sshll.u32 [#allocation3], 4
      %s17 = int_to_ptr.vmem [resolvable:$true] %s16
      %22 = dma.hbm_to_vmem [thread:$0]  %s1, 1024, %s17, [#allocation4], 64, 64, 4
    $region9: #{upsample_forward.1} parent=1 // pred_fallthru
      _
    // Predicated region
    $region10: #{upsample_forward.1} parent=1 // pred_check
      _
    $region11: #{upsample_forward.1} parent=1 // pred_check_branch
      %24 = sbr.rel (0) target = $region13
    $region12: #{upsample_forward.1} parent=1 // pred_region
      _
    $region13: #{upsample_forward.1} parent=1 // pred_fallthru
      _
    // Predicated region
    $region14: #{upsample_forward.1} parent=1 // pred_check
      _
    $region15: #{upsample_forward.1} parent=1 // pred_check_branch
      %26 = sbr.rel (0) target = $region17
    $region16: #{upsample_forward.1} parent=1 // pred_region
      %27 = dma.done [#allocation4], 1024
    $region17: #{upsample_forward.1} parent=1 // pred_fallthru
      _
    %p29 = scmp.eq.s32.totalorder 0, 0
    // Predicated region
    $region18: #{upsample_forward.1} parent=1 // pred_check
      %p30 = pneg %p29
    $region19: #{upsample_forward.1} parent=1 // pred_check_branch
      %32 = sbr.rel (%p30) target = $region21
    $region20: #{upsample_forward.1} parent=1 // pred_region
      %33 = vst [vmem:[#allocation2] sm:$0xff] 0.0
      %34 = vst [vmem:[#allocation2 + $0x8] sm:$0xff] 0.0
    $region21: #{upsample_forward.1} parent=1 // pred_fallthru
      _
    %v35 = vld [vmem:[#allocation2] sm:$0xff]
    %v36 = vld [vmem:[#allocation2 + $0x8] sm:$0xff]
    %v37 = vld [vmem:[%s0] sm:$0xf]
    %v38 = vld [vmem:[%s0 + $0x4] sm:$0xf]
    %v39 = vld [vmem:[#allocation3] sm:$0xf]
    %v40 = vld [vmem:[#allocation3 + $0x4] sm:$0xf]
    %v41 = vld [vmem:[#allocation3 + $0x8] sm:$0xf]
    %v42 = vld [vmem:[#allocation3 + $0xc] sm:$0xf]
    %v43 = vld [vmem:[#allocation3 + $0x10] sm:$0xf]
    %v44 = vld [vmem:[#allocation3 + $0x14] sm:$0xf]
    %v45 = vld [vmem:[#allocation3 + $0x18] sm:$0xf]
    %v46 = vld [vmem:[#allocation3 + $0x1c] sm:$0xf]
    %v47 = vld [vmem:[#allocation3 + $0x20] sm:$0xf]
    %v48 = vld [vmem:[#allocation3 + $0x24] sm:$0xf]
    %v49 = vld [vmem:[#allocation3 + $0x28] sm:$0xf]
    %v50 = vld [vmem:[#allocation3 + $0x2c] sm:$0xf]
    %v51 = vld [vmem:[#allocation3 + $0x30] sm:$0xf]
    %v52 = vld [vmem:[#allocation3 + $0x34] sm:$0xf]
    %v53 = vld [vmem:[#allocation3 + $0x38] sm:$0xf]
    %v54 = vld [vmem:[#allocation3 + $0x3c] sm:$0xf]
    %v57 = vunpack.c.l.b16 %v37
    %v58 = vunpack.c.l.b16 %v38
    %v59 = vpack.c.b16 %v58, %v57
    %v77 = vunpack.c.l.b16 %v39
    %v78 = vunpack.c.l.b16 %v40
    %v79 = vunpack.c.l.b16 %v41
    %v80 = vunpack.c.l.b16 %v42
    %v81 = vunpack.c.l.b16 %v43
    %v82 = vunpack.c.l.b16 %v44
    %v83 = vunpack.c.l.b16 %v45
    %v84 = vunpack.c.l.b16 %v46
    %v85 = vunpack.c.l.b16 %v47
    %v86 = vunpack.c.l.b16 %v48
    %v87 = vunpack.c.l.b16 %v49
    %v88 = vunpack.c.l.b16 %v50
    %v89 = vunpack.c.l.b16 %v51
    %v90 = vunpack.c.l.b16 %v52
    %v91 = vunpack.c.l.b16 %v53
    %v92 = vunpack.c.l.b16 %v54
    %v93 = vpack.c.b16 %v78, %v77
    %v94 = vpack.c.b16 %v80, %v79
    %v95 = vpack.c.b16 %v82, %v81
    %v96 = vpack.c.b16 %v84, %v83
    %v97 = vpack.c.b16 %v86, %v85
    %v98 = vpack.c.b16 %v88, %v87
    %v99 = vpack.c.b16 %v90, %v89
    %v100 = vpack.c.b16 %v92, %v91
    %109 = vmatprep.subr.bf16.mxu0 0
    %110 = vmatpush1.bf16.msra.mxu0 %v93
    %111 = vmatprep.subr.bf16.mxu0 0
    %112 = vmatpush1.bf16.msra.mxu0 %v94
    %113 = vmatprep.subr.bf16.mxu0 0
    %114 = vmatpush1.bf16.msra.mxu0 %v95
    %115 = vmatprep.subr.bf16.mxu0 0
    %116 = vmatpush1.bf16.msra.mxu0 %v96
    %117 = vmatprep.subr.bf16.mxu0 0
    %118 = vmatpush1.bf16.msra.mxu0 %v97
    %119 = vmatprep.subr.bf16.mxu0 0
    %120 = vmatpush1.bf16.msra.mxu0 %v98
    %121 = vmatprep.subr.bf16.mxu0 0
    %122 = vmatpush1.bf16.msra.mxu0 %v99
    %123 = vmatprep.subr.bf16.mxu0 0
    %124 = vmatpush1.bf16.msra.mxu0 %v100
    %125 = vmatprep.subr.bf16.mxu0 0
    %126 = vmatpush1.bf16.msra.mxu0 0
    %127 = vmatprep.subr.bf16.mxu0 0
    %128 = vmatpush1.bf16.msra.mxu0 0
    %129 = vmatprep.subr.bf16.mxu0 0
    %130 = vmatpush1.bf16.msra.mxu0 0
    %131 = vmatprep.subr.bf16.mxu0 0
    %132 = vmatpush1.bf16.msra.mxu0 0
    %133 = vmatprep.subr.bf16.mxu0 0
    %134 = vmatpush1.bf16.msra.mxu0 0
    %135 = vmatprep.subr.bf16.mxu0 0
    %136 = vmatpush1.bf16.msra.mxu0 0
    %137 = vmatprep.subr.bf16.mxu0 0
    %138 = vmatpush1.bf16.msra.mxu0 0
    %139 = vmatprep.subr.bf16.mxu0 0
    %140 = vmatpush1.bf16.msra.mxu0 0
    %141 = vmatprep.mubr.bf16.mxu0 0
    %142 = vmatmul.mubr.bf16.gmra.mrb[0].mxu0 %v59
    %v143 = vpop.f32.mrb[0].mxu0
    %v144 = vadd.f32 0.0, %v143
    %v145 = vpop.f32.mrb[0].mxu0
    %v146 = vpop.f32.mrb[0].mxu0
    %v147 = vadd.f32 0.0, %v146
    %v148 = vpop.f32.mrb[0].mxu0
    %149 = vdwg.mxu0
    %v150 = vadd.f32 %v35, %v144
    %v151 = vadd.f32 %v36, %v147
    %152 = vst [vmem:[#allocation2] sm:$0xff] %v150
    %153 = vst [vmem:[#allocation2 + $0x8] sm:$0xff] %v151
    // Predicated region
    $region22: #{upsample_forward.1} parent=1 // pred_check
      %p154 = pneg %p29
    $region23: #{upsample_forward.1} parent=1 // pred_check_branch
      %156 = sbr.rel (%p154) target = $region25
    $region24: #{upsample_forward.1} parent=1 // pred_region
      %v157 = vld [vmem:[#allocation2] sm:$0xff]
      %v158 = vld [vmem:[#allocation2 + $0x8] sm:$0xff]
      %v159 = vld [vmem:[%s2] sm:$0x1]
      %v161 = vlaneseq
      %v162 = vshrl.u32 %v161, 7
      %v163 = vsub.s32 0, %v162
      %v164 = vrot.slane %v159, %v163
      %v166 = vadd.f32 %v157, %v164
      %v167 = vadd.f32 %v158, %v164
      %168 = vst [vmem:[%s3] sm:$0xff] %v166
      %169 = vst [vmem:[%s3 + $0x8] sm:$0xff] %v167
    $region25: #{upsample_forward.1} parent=1 // pred_fallthru
      _
    // Predicated region
    $region26: #{upsample_forward.1} parent=1 // pred_check
      _
    $region27: #{upsample_forward.1} parent=1 // pred_check_branch
      %171 = sbr.rel (0) target = $region29
    $region28: #{upsample_forward.1} parent=1 // pred_region
      _
    $region29: #{upsample_forward.1} parent=1 // pred_fallthru
      _
    // Predicated region
    $region30: #{upsample_forward.1} parent=1 // pred_check
      _
    $region31: #{upsample_forward.1} parent=1 // pred_check_branch
      %173 = sbr.rel (0) target = $region33
    $region32: #{upsample_forward.1} parent=1 // pred_region
      _
    $region33: #{upsample_forward.1} parent=1 // pred_fallthru
      _
    %174 = vsyncpa [#allocation4], 1

</llo_original>
